<compile_context>
chip_gen: v6e
topology: v6e:2x2x1
jax: 0.10.0
libtpu: 0.0.40
codegen_flags: <defaults>
</compile_context>

<pallas_src>
import jax
import jax.numpy as jnp
from jax.experimental import pallas as pl
from jax.experimental.pallas import tpu as pltpu

LANE = 128


def _round_up(x, m):
    return ((x + m - 1) // m) * m


def _sublane_granule(dtype):
    """Packed sublane tile for the second-to-last dim: 8 (f32), 16 (bf16), 32 (int8)."""
    return max(8, 32 // jnp.dtype(dtype).itemsize)


def _pick_divisor_tile(padded, target, granule):
    """Largest multiple of `granule` that divides `padded` and is <= target."""
    t = min((max(target, granule) // granule) * granule, padded)
    while t > granule:
        if padded % t == 0:
            return t
        t -= granule
    return granule


def _split_tile(padded, granule):
    """Largest granule-multiple tile dividing `padded` that yields >= 2 blocks, or None."""
    t = ((padded // 2) // granule) * granule
    while t >= granule:
        if padded % t == 0:
            return t
        t -= granule
    return None


# ---------------------------------------------------------------------------
# Kernels
# ---------------------------------------------------------------------------

def _linear_kernel_out_acc(x_ref, w_ref, b_ref, o_ref):
    """y = x @ w + b, accumulating directly into the resident f32 output block."""
    k = pl.program_id(2)

    @pl.when(k == 0)
    def _():
        o_ref[...] = jnp.zeros_like(o_ref)

    o_ref[...] += jnp.dot(x_ref[...], w_ref[...],
                          preferred_element_type=jnp.float32)

    @pl.when(k == pl.num_programs(2) - 1)
    def _():
        o_ref[...] += b_ref[...].astype(o_ref.dtype)


def _linear_kernel_scratch_acc(x_ref, w_ref, b_ref, o_ref, acc_ref):
    """y = x @ w + b with a separate f32 accumulator (non-f32 outputs)."""
    k = pl.program_id(2)

    @pl.when(k == 0)
    def _():
        acc_ref[...] = jnp.zeros_like(acc_ref)

    acc_ref[...] += jnp.dot(x_ref[...], w_ref[...],
                            preferred_element_type=jnp.float32)

    @pl.when(k == pl.num_programs(2) - 1)
    def _():
        o_ref[...] = (acc_ref[...] + b_ref[...]).astype(o_ref.dtype)


# ---------------------------------------------------------------------------
# Wrapper
# ---------------------------------------------------------------------------

def prepack_linear(weight, bias, *, compute_dtype=None):
    """Transpose + pad nn.Linear params once, outside the per-call path.

    weight: (N, K) torch.nn.Linear layout; bias: (N,).
    Returns (w_packed (Kp, Np), b_packed (1, Np)) with Kp, Np multiples of 128,
    i.e. a lane-dense MXU RHS that needs no in-kernel relayout.
    """
    N, K = weight.shape
    dtype = compute_dtype if compute_dtype is not None else weight.dtype
    Kp, Np = _round_up(K, LANE), _round_up(N, LANE)
    w_packed = jnp.zeros((Kp, Np), dtype).at[:K, :N].set(weight.T.astype(dtype))
    b_packed = jnp.zeros((1, Np), jnp.float32).at[0, :N].set(bias.astype(jnp.float32))
    return w_packed, b_packed


def linear_forward_packed(x, w_packed, b_packed, n_out, *,
                          tm_target=256, tn_target=512, tk_target=1024,
                          out_dtype=None):
    """y = x @ W.T + b using a prepacked (Kp, Np) weight. Returns (M, n_out)."""
    M, K = x.shape
    Kp, Np = w_packed.shape
    assert K <= Kp and n_out <= Np
    out_dtype = out_dtype or jnp.promote_types(x.dtype, w_packed.dtype)

    sub = _sublane_granule(x.dtype)
    Mp = _round_up(M, sub)
    tm = _pick_divisor_tile(Mp, tm_target, sub)
    tn = _pick_divisor_tile(Np, tn_target, LANE)
    tk = _pick_divisor_tile(Kp, tk_target, LANE)

    # v7x megacore: make sure the parallel (M, N) grid has at least 2 blocks.
    if (Mp // tm) * (Np // tn) == 1:
        tn_half = _split_tile(Np, LANE)
        if tn_half is not None:
            tn = tn_half
        else:
            tm_half = _split_tile(Mp, sub)
            if tm_half is not None:
                tm = tm_half

    x_p = x
    if Mp != M or Kp != K:
        x_p = jnp.zeros((Mp, Kp), x.dtype).at[:M, :K].set(x)

    grid = (Mp // tm, Np // tn, Kp // tk)
    grid_m, grid_n, _ = grid

    in_item = jnp.dtype(x.dtype).itemsize
    w_item = jnp.dtype(w_packed.dtype).itemsize
    out_item = jnp.dtype(out_dtype).itemsize

    accumulate_in_out = jnp.dtype(out_dtype) == jnp.float32
    kernel = _linear_kernel_out_acc if accumulate_in_out else _linear_kernel_scratch_acc
    scratch_shapes = [] if accumulate_in_out else [pltpu.VMEM((tm, tn), jnp.float32)]

    # VMEM budget: double-buffered x / W / bias tiles + double-buffered output
    # (+ optional f32 accumulator), with 50% headroom; well under v7x's 64 MiB/TC.
    vmem_bytes = (2 * (tm * tk * in_item + tk * tn * w_item + tn * 4)
                  + 2 * tm * tn * out_item
                  + (0 if accumulate_in_out else tm * tn * 4))
    vmem_limit = int(min(max(int(1.5 * vmem_bytes), 4 << 20), 64 << 20))

    cost = pl.CostEstimate(
        flops=2 * Mp * Kp * Np,
        bytes_accessed=(Mp * Kp * in_item * grid_n      # x re-read once per N tile
                        + Kp * Np * w_item * grid_m     # W re-read once per M tile
                        + Np * 4 * grid_m               # bias
                        + Mp * Np * out_item),          # output
        transcendentals=0,
    )

    out_p = pl.pallas_call(
        kernel,
        out_shape=jax.ShapeDtypeStruct((Mp, Np), out_dtype),
        grid_spec=pltpu.PrefetchScalarGridSpec(
            num_scalar_prefetch=0,
            grid=grid,
            in_specs=[
                pl.BlockSpec((tm, tk), lambda i, j, k: (i, k)),
                pl.BlockSpec((tk, tn), lambda i, j, k: (k, j)),
                pl.BlockSpec((1, tn), lambda i, j, k: (0, j)),
            ],
            out_specs=pl.BlockSpec((tm, tn), lambda i, j, k: (i, j)),
            scratch_shapes=scratch_shapes,
        ),
        compiler_params=pltpu.CompilerParams(
            dimension_semantics=("parallel", "parallel", "arbitrary"),
            vmem_limit_bytes=vmem_limit,
        ),
        cost_estimate=cost,
    )(x_p, w_packed, b_packed)

    return out_p[:M, :n_out]


class LR:
    """JAX/Pallas port of the PyTorch `LR` module: forward(x) = Linear(x)."""

    def __init__(self, input_size, output_size, key):
        kw, kb = jax.random.split(key)
        bound = 1.0 / (input_size ** 0.5)
        self.weight = jax.random.uniform(kw, (output_size, input_size),
                                         jnp.float32, minval=-bound, maxval=bound)
        self.bias = jax.random.uniform(kb, (output_size,),
                                       jnp.float32, minval=-bound, maxval=bound)
        self.input_size = input_size
        self.output_size = output_size
        # Prepack (transpose + pad) once at parameter-setup time so the per-call
        # path never pays an extra HBM round trip for W.
        self.w_packed, self.b_packed = prepack_linear(self.weight, self.bias)

    def __call__(self, x):
        M, K = x.shape
        N = self.output_size
        # Tiny problems (e.g. the 1x2 toy input): padding to (8,128) tiles plus
        # kernel launch costs far more than the op itself; let XLA's fused dot win.
        if M <= 8 and K <= LANE and N <= LANE:
            return jnp.dot(x, self.weight.T) + self.bias[None, :]
        return linear_forward_packed(x, self.w_packed, self.b_packed, N)


if __name__ == "__main__":
    key = jax.random.PRNGKey(0)
    k1, k2, k3 = jax.random.split(key, 3)

    # ---- Exact toy case implied by the script: input_size=2, output_size=1 ----
    model_small = LR(2, 1, k1)
    x_small = jnp.array([[1.0, 2.0]], jnp.float32)
    y_small = jax.block_until_ready(model_small(x_small))
    ref_small = x_small @ model_small.weight.T + model_small.bias[None, :]
    assert y_small.shape == (1, 1)
    assert jnp.allclose(y_small, ref_small, atol=1e-5, rtol=1e-5)

    # ---- Larger, deliberately awkward shape to exercise the Pallas kernel ----
    # (K=640, N=272, M=160: verifies the fixed tile picker adds no padding blow-up)
    model_big = LR(640, 272, k2)
    x_big = jax.random.normal(k3, (160, 640), jnp.float32)
    y_big = jax.block_until_ready(model_big(x_big))
    ref_big = (jnp.dot(x_big, model_big.weight.T,
                       precision=jax.lax.Precision.HIGHEST)
               + model_big.bias[None, :])
    assert y_big.shape == (160, 272)
    assert jnp.allclose(y_big, ref_big, atol=2e-4, rtol=2e-4)

    print("KERNEL_OK")
</pallas_src>

<mosaic_0001>
module attributes {stable_mosaic.version = 11 : i64} {
  func.func @_linear_kernel_out_acc(%arg0: i32, %arg1: i32, %arg2: i32, %arg3: memref<160x640xf32, #tpu.memory_space<vmem>>, %arg4: memref<640x128xf32, #tpu.memory_space<vmem>>, %arg5: memref<1x128xf32, #tpu.memory_space<vmem>>, %arg6: memref<160x128xf32, #tpu.memory_space<vmem>>) attributes {dimension_semantics = [#tpu.dimension_semantics<parallel>, #tpu.dimension_semantics<parallel>, #tpu.dimension_semantics<arbitrary>], iteration_bounds = array<i64: 1, 3, 1>, scalar_prefetch = 0 : i64, scratch_operands = 0 : i64, tpu.core_type = #tpu.core_type<tc>, window_params = [{transform_indices = @transform_0, window_bounds = array<i64: 160, 640>}, {transform_indices = @transform_1, window_bounds = array<i64: 640, 128>}, {transform_indices = @transform_2, window_bounds = array<i64: 1, 128>}, {transform_indices = @transform_3, window_bounds = array<i64: 160, 128>}]} {
    %c0_i32 = arith.constant 0 : i32
    %0 = arith.cmpi eq, %arg2, %c0_i32 : i32
    %1 = arith.extui %0 : i1 to i32
    %c0_i32_0 = arith.constant 0 : i32
    %2 = arith.cmpi ne, %1, %c0_i32_0 : i32
    scf.if %2 {
      %cst_10 = arith.constant 0.000000e+00 : f32
      %12 = vector.broadcast %cst_10 : f32 to vector<160x128xf32>
      %c0_11 = arith.constant 0 : index
      %c0_12 = arith.constant 0 : index
      %13 = vector.load %arg6[%c0_11, %c0_12] : memref<160x128xf32, #tpu.memory_space<vmem>>, vector<160x128xf32>
      tpu.vector_store %arg6[%c0_11, %c0_12], %12 {strides = array<i32>} : memref<160x128xf32, #tpu.memory_space<vmem>>, vector<160x128xf32>,
    } else {
    }
    %c0 = arith.constant 0 : index
    %c0_1 = arith.constant 0 : index
    %3 = vector.load %arg6[%c0, %c0_1] : memref<160x128xf32, #tpu.memory_space<vmem>>, vector<160x128xf32>
    %c0_2 = arith.constant 0 : index
    %c0_3 = arith.constant 0 : index
    %4 = vector.load %arg3[%c0_2, %c0_3] : memref<160x640xf32, #tpu.memory_space<vmem>>, vector<160x640xf32>
    %c0_4 = arith.constant 0 : index
    %c0_5 = arith.constant 0 : index
    %5 = vector.load %arg4[%c0_4, %c0_5] : memref<640x128xf32, #tpu.memory_space<vmem>>, vector<640x128xf32>
    %cst = arith.constant dense<0.000000e+00> : vector<160x128xf32>
    %6 = tpu.matmul %4, %5, %cst {dimension_numbers = #tpu.dot_dimension_numbers<[1], [0], [0], [1], [0, 0, 1, 1], [], []>} : vector<160x640xf32>, vector<640x128xf32>, vector<160x128xf32> -> vector<160x128xf32>
    %7 = arith.addf %3, %6 : vector<160x128xf32>
    %c0_6 = arith.constant 0 : index
    %c0_7 = arith.constant 0 : index
    %8 = vector.load %arg6[%c0_6, %c0_7] : memref<160x128xf32, #tpu.memory_space<vmem>>, vector<160x128xf32>
    tpu.vector_store %arg6[%c0_6, %c0_7], %7 {strides = array<i32>} : memref<160x128xf32, #tpu.memory_space<vmem>>, vector<160x128xf32>,
    %c0_i32_8 = arith.constant 0 : i32
    %9 = arith.cmpi eq, %arg2, %c0_i32_8 : i32
    %10 = arith.extui %9 : i1 to i32
    %c0_i32_9 = arith.constant 0 : i32
    %11 = arith.cmpi ne, %10, %c0_i32_9 : i32
    scf.if %11 {
      %c0_10 = arith.constant 0 : index
      %c0_11 = arith.constant 0 : index
      %12 = vector.load %arg6[%c0_10, %c0_11] : memref<160x128xf32, #tpu.memory_space<vmem>>, vector<160x128xf32>
      %c0_12 = arith.constant 0 : index
      %c0_13 = arith.constant 0 : index
      %13 = vector.load %arg5[%c0_12, %c0_13] : memref<1x128xf32, #tpu.memory_space<vmem>>, vector<1x128xf32>
      %14 = vector.broadcast %13 : vector<1x128xf32> to vector<160x128xf32>
      %15 = arith.addf %12, %14 : vector<160x128xf32>
      %c0_14 = arith.constant 0 : index
      %c0_15 = arith.constant 0 : index
      %16 = vector.load %arg6[%c0_14, %c0_15] : memref<160x128xf32, #tpu.memory_space<vmem>>, vector<160x128xf32>
      tpu.vector_store %arg6[%c0_14, %c0_15], %15 {strides = array<i32>} : memref<160x128xf32, #tpu.memory_space<vmem>>, vector<160x128xf32>,
    } else {
    }
    return
  }
  func.func @transform_0(%arg0: i32, %arg1: i32, %arg2: i32) -> (i32, i32) {
    %c0_i32 = arith.constant 0 : i32
    return %arg0, %arg2 : i32, i32
  }
  func.func @transform_1(%arg0: i32, %arg1: i32, %arg2: i32) -> (i32, i32) {
    %c0_i32 = arith.constant 0 : i32
    return %arg2, %arg1 : i32, i32
  }
  func.func @transform_2(%arg0: i32, %arg1: i32, %arg2: i32) -> (i32, i32) {
    %c0_i32 = arith.constant 0 : i32
    %c0_i32_0 = arith.constant 0 : i32
    return %c0_i32, %arg1 : i32, i32
  }
  func.func @transform_3(%arg0: i32, %arg1: i32, %arg2: i32) -> (i32, i32) {
    %c0_i32 = arith.constant 0 : i32
    return %arg0, %arg1 : i32, i32
  }
}

</mosaic_0001>

<llo_original>
// kernel: tpu_custom_call.1
$region0: #{tpu_custom_call.1}
  #allocation0 [shape = 'u32[]', space=smem, size = 0x4, offset = 0x4, fixed_abs, tag = 'smem constant byte address 0x4 - core index']
  #allocation1 [shape = 'u32[144,128]{1,0:T(1,128)}', space=vmem, size = 0x12000, scoped, tag = 'internal scratch']
  %s0 = inlined_call_operand.hbm [shape: f32[160,640], index: 0, kind: input, shape index: {}]
  %s1 = inlined_call_operand.hbm [shape: f32[640,384], index: 1, kind: input, shape index: {}]
  %s2 = inlined_call_operand.vmem [shape: f32[1,384], index: 2, kind: input, shape index: {}]
  %s3 = inlined_call_operand.hbm [shape: f32[160,384], index: 3, kind: output, shape index: {}]
  %s4 = sld [smem:[#allocation0]]
  $region61: #{tpu_custom_call.1} parent=0
    _
  %s6 = ssub.s32 1, %s4
  %s7 = scalar_select 0, %s6, %s4
  $region1: #{tpu_custom_call.1} parent=0
    #allocation2 [shape = 'u8[409600]{0}', space=vmem, size = 0x64000, scoped, tag = 'input window, operand 0, single buffered']
    #allocation3 [shape = 's32[2]{0}', space=sflag, size = 0x8, scoped, tag = 'scoped memory for tpu_custom_call.1']
    #allocation4 [shape = 's32[2]{0}', space=sflag, size = 0x8, scoped, tag = 'scoped memory for tpu_custom_call.1']
    #allocation5 [shape = 'u8[655360]{0}', space=vmem, size = 0xa0000, scoped, tag = 'input window, operand 1']
    #allocation6 [shape = 's32[2]{0}', space=sflag, size = 0x8, scoped, tag = 'scoped memory for tpu_custom_call.1']
    #allocation7 [shape = 'u8[163840]{0}', space=vmem, size = 0x28000, scoped, tag = 'output window, operand 0']
    %8 = vsyncpa [#allocation3], 0
    %9 = vsyncpa [#allocation6], 0
    %s10 = scalar_lea.sflag [#allocation6], 1
    %11 = vsyncpa %s10, 0
    %12 = vsyncpa [#allocation4], 0
    %s13 = scalar_lea.sflag [#allocation4], 1
    %14 = vsyncpa %s13, 0
    loop: start=0, step=1, limit=5
    $region2: #{tpu_custom_call.1} parent=1 // loop_pre_header
      _
    $region3: #{tpu_custom_call.1} parent=1 // loop_header
      %s16 = sphi 0, %s20
      %p17 = scmp.ge.s32.totalorder %s16, 5
      %s23 = sphi 0, %s42
      %s24 = sphi 0, %s38
      %s25 = sphi 0, %s34
      %s26 = sphi 0, %s23
      %s27 = sphi 0, %s24
      %s28 = sphi 0, %s25
      %s29 = sphi 0, %s26
      %s30 = sphi 0, %s27
      %s31 = sphi 0, %s28
      %s47 = sphi 0, %s49
      %s50 = sphi 0, %s47
      %s51 = sphi 0, %s50
      %s67 = sphi 0, %s51
      %s75 = sphi 0, %s77
      %s78 = sphi 0, %s75
      %s79 = sphi 0, %s78
      %s95 = sphi 0, %s79
      %s101 = sphi 0, %s103
      %s104 = sphi 0, %s101
      %s105 = sphi 0, %s104
      %s121 = sphi 0, %s105
      %s129 = sphi 0, %s131
      %s132 = sphi 0, %s129
      %s133 = sphi 0, %s132
      %s149 = sphi 0, %s133
    $region4: #{tpu_custom_call.1} parent=1 // loop_header_branch
      %19 = sbr.rel (%p17) target = $region8
    $region5: #{tpu_custom_call.1} parent=1 // loop_body
      %s21 = ssub.s32 %s16, 1
      %s22 = ssub.s32 %s16, 2
      %s32 = sadd.s32 1, %s25
      %p33 = scmp.ge.s32.totalorder %s32, 1
      %s34 = scalar_select %p33, 0, %s32
      %s35 = sadd.s32 1, %s24
      %s36 = scalar_select %p33, %s35, %s24
      %p37 = scmp.ge.s32.totalorder %s36, 3
      %s38 = scalar_select %p37, 0, %s36
      %s39 = sadd.s32 1, %s23
      %s40 = scalar_select %p37, %s39, %s23
      %p41 = scmp.ge.s32.totalorder %s40, 1
      %s42 = scalar_select %p41, 0, %s40
      %s43 = ssub.s32 %s23, %s42
      %s44 = ssub.s32 %s25, %s34
      %s45 = sor.u32 %s43, %s44
      %p46 = scmp.eq.s32.totalorder %s45, 0
      %s48 = sadd.s32 %s47, 1
      %s49 = scalar_select %p46, %s47, %s48
      %p52 = pneg %p46
      %p53 = scmp.eq.s32.totalorder %s16, 2
      %p54 = por %p52, %p53
      %p55 = scmp.ne.s32.totalorder %s47, %s50
      %p56 = scmp.eq.s32.totalorder %s16, 0
      %p57 = por %p55, %p56
      %p58 = scmp.ne.s32.totalorder %s47, %s50
      %p59 = scmp.eq.s32.totalorder %s21, 2
      %p60 = por %p58, %p59
      %p61 = scmp.ne.s32.totalorder %s50, %s51
      %p62 = scmp.eq.s32.totalorder %s21, 0
      %p63 = por %p61, %p62
      %p64 = scmp.ne.s32.totalorder %s50, %s51
      %p65 = scmp.eq.s32.totalorder %s22, 2
      %p66 = por %p64, %p65
      %p68 = scmp.ne.s32.totalorder %s51, %s67
      %p69 = scmp.eq.s32.totalorder %s22, 0
      %p70 = por %p68, %p69
      %s71 = ssub.s32 %s25, %s34
      %s72 = ssub.s32 %s24, %s38
      %s73 = sor.u32 %s71, %s72
      %p74 = scmp.eq.s32.totalorder %s73, 0
      %s76 = sadd.s32 %s75, 1
      %s77 = scalar_select %p74, %s75, %s76
      %p80 = pneg %p74
      %p81 = scmp.eq.s32.totalorder %s16, 2
      %p82 = por %p80, %p81
      %p83 = scmp.ne.s32.totalorder %s75, %s78
      %p84 = scmp.eq.s32.totalorder %s16, 0
      %p85 = por %p83, %p84
      %p86 = scmp.ne.s32.totalorder %s75, %s78
      %p87 = scmp.eq.s32.totalorder %s21, 2
      %p88 = por %p86, %p87
      %p89 = scmp.ne.s32.totalorder %s78, %s79
      %p90 = scmp.eq.s32.totalorder %s21, 0
      %p91 = por %p89, %p90
      %p92 = scmp.ne.s32.totalorder %s78, %s79
      %p93 = scmp.eq.s32.totalorder %s22, 2
      %p94 = por %p92, %p93
      %p96 = scmp.ne.s32.totalorder %s79, %s95
      %p97 = scmp.eq.s32.totalorder %s22, 0
      %p98 = por %p96, %p97
      %s99 = ssub.s32 %s24, %s38
      %p100 = scmp.eq.s32.totalorder %s99, 0
      %s102 = sadd.s32 %s101, 1
      %s103 = scalar_select %p100, %s101, %s102
      %p106 = pneg %p100
      %p107 = scmp.eq.s32.totalorder %s16, 2
      %p108 = por %p106, %p107
      %p109 = scmp.ne.s32.totalorder %s101, %s104
      %p110 = scmp.eq.s32.totalorder %s16, 0
      %p111 = por %p109, %p110
      %p112 = scmp.ne.s32.totalorder %s101, %s104
      %p113 = scmp.eq.s32.totalorder %s21, 2
      %p114 = por %p112, %p113
      %p115 = scmp.ne.s32.totalorder %s104, %s105
      %p116 = scmp.eq.s32.totalorder %s21, 0
      %p117 = por %p115, %p116
      %p118 = scmp.ne.s32.totalorder %s104, %s105
      %p119 = scmp.eq.s32.totalorder %s22, 2
      %p120 = por %p118, %p119
      %p122 = scmp.ne.s32.totalorder %s105, %s121
      %p123 = scmp.eq.s32.totalorder %s22, 0
      %p124 = por %p122, %p123
      %s125 = ssub.s32 %s23, %s42
      %s126 = ssub.s32 %s24, %s38
      %s127 = sor.u32 %s125, %s126
      %p128 = scmp.eq.s32.totalorder %s127, 0
      %s130 = sadd.s32 %s129, 1
      %s131 = scalar_select %p128, %s129, %s130
      %p134 = pneg %p128
      %p135 = scmp.eq.s32.totalorder %s16, 2
      %p136 = por %p134, %p135
      %p137 = scmp.ne.s32.totalorder %s129, %s132
      %p138 = scmp.eq.s32.totalorder %s16, 0
      %p139 = por %p137, %p138
      %p140 = scmp.ne.s32.totalorder %s129, %s132
      %p141 = scmp.eq.s32.totalorder %s21, 2
      %p142 = por %p140, %p141
      %p143 = scmp.ne.s32.totalorder %s132, %s133
      %p144 = scmp.eq.s32.totalorder %s21, 0
      %p145 = por %p143, %p144
      %p146 = scmp.ne.s32.totalorder %s132, %s133
      %p147 = scmp.eq.s32.totalorder %s22, 2
      %p148 = por %p146, %p147
      %p150 = scmp.ne.s32.totalorder %s133, %s149
      %p151 = scmp.eq.s32.totalorder %s22, 0
      %p152 = por %p150, %p151
      %p153 = scmp.le.s32.totalorder 1, %s16
      %p154 = scmp.lt.s32.totalorder %s16, 4
      %p155 = pnand %p153, %p154
      %p156 = pneg %p155
      // Predicated region
      $region9: #{tpu_custom_call.1} parent=5 // pred_check
        _
      $region10: #{tpu_custom_call.1} parent=5 // pred_check_branch
        %158 = sbr.rel (%p155) target = $region12
      $region11: #{tpu_custom_call.1} parent=5 // pred_region
        %s159 = ssub.s32 %s16, 1
        // Predicated region
        $region13: #{tpu_custom_call.1} parent=11 // pred_check
          %p160 = pneg %p63
        $region14: #{tpu_custom_call.1} parent=11 // pred_check_branch
          %162 = sbr.rel (%p160) target = $region16
        $region15: #{tpu_custom_call.1} parent=11 // pred_region
          %s163 = smul.u32 20, %s26
          %s164 = smul.u32 5, %s28
          %s166 = ssub.s32 12800, 12800
          %167 = vsyncadd [#allocation3], %s166
          %s168 = smul.addr %s163, 5
          %s169 = sadd.s32 %s164, %s168
          %s170 = smul.addr %s169, 128
          %s171 = scalar_lea.hbm %s0, %s170
          %s172 = sshll.u32 [#allocation2], 4
          %s173 = int_to_ptr.vmem [resolvable:$true] %s172
          %178 = dma.hbm_to_vmem [thread:$0]  %s171, 12800, %s173, [#allocation3], 640, 640, 40
        $region16: #{tpu_custom_call.1} parent=11 // pred_fallthru
          _
      $region12: #{tpu_custom_call.1} parent=5 // pred_fallthru
        _
      %p179 = scmp.lt.s32.totalorder %s16, 3
      // Predicated region
      $region17: #{tpu_custom_call.1} parent=5 // pred_check
        %p180 = pneg %p179
      $region18: #{tpu_custom_call.1} parent=5 // pred_check_branch
        %182 = sbr.rel (%p180) target = $region20
      $region19: #{tpu_custom_call.1} parent=5 // pred_region
        // Predicated region
        $region21: #{tpu_custom_call.1} parent=19 // pred_check
          %p183 = pneg %p85
        $region22: #{tpu_custom_call.1} parent=19 // pred_check_branch
          %185 = sbr.rel (%p183) target = $region24
        $region23: #{tpu_custom_call.1} parent=19 // pred_region
          %s186 = sand.u32 %s75, 1
          %s187 = scalar_lea.sflag [#allocation6], %s186
          %s188 = sand.u32 %s75, 1
          %s189 = smul.addr %s188, 640
          %s190 = scalar_lea.vmem [#allocation5], %s189
          %s191 = smul.u32 80, %s25
          %s193 = ssub.s32 10240, 10240
          %194 = vsyncadd %s187, %s193
          %s195 = smul.addr %s191, 3
          %s196 = sadd.s32 %s24, %s195
          %s197 = smul.addr %s196, 128
          %s198 = scalar_lea.hbm %s1, %s197
          %s199 = sshll.u32 %s190, 4
          %s200 = int_to_ptr.vmem [resolvable:$true] %s199
          %205 = dma.hbm_to_vmem [thread:$0]  %s198, 10240, %s200, %s187, 384, 128, 8
        $region24: #{tpu_custom_call.1} parent=19 // pred_fallthru
          _
        // Predicated region
        $region25: #{tpu_custom_call.1} parent=19 // pred_check
          %p206 = pneg %p111
        $region26: #{tpu_custom_call.1} parent=19 // pred_check_branch
          %208 = sbr.rel (%p206) target = $region28
        $region27: #{tpu_custom_call.1} parent=19 // pred_region
          %p209 = scmp.lt.s32.totalorder %s24, 2
          %s210 = scalar_select %p209, %s24, 2
          %s211 = scalar_lea.vmem %s2, %s210
        $region28: #{tpu_custom_call.1} parent=19 // pred_fallthru
          _
      $region20: #{tpu_custom_call.1} parent=5 // pred_fallthru
        _
      %p212 = scmp.le.s32.totalorder 1, %s16
      %p213 = scmp.lt.s32.totalorder %s16, 4
      %p214 = pnand %p212, %p213
      %p215 = pneg %p214
      // Predicated region
      $region29: #{tpu_custom_call.1} parent=5 // pred_check
        _
      $region30: #{tpu_custom_call.1} parent=5 // pred_check_branch
        %217 = sbr.rel (%p214) target = $region32
      $region31: #{tpu_custom_call.1} parent=5 // pred_region
        %s218 = ssub.s32 %s16, 1
        // Predicated region
        $region33: #{tpu_custom_call.1} parent=31 // pred_check
          %p219 = pneg %p63
        $region34: #{tpu_custom_call.1} parent=31 // pred_check_branch
          %221 = sbr.rel (%p219) target = $region36
        $region35: #{tpu_custom_call.1} parent=31 // pred_region
          %222 = dma.done [#allocation3], 12800
        $region36: #{tpu_custom_call.1} parent=31 // pred_fallthru
          _
        %s223 = sand.u32 %s78, 1
        %s224 = scalar_lea.sflag [#allocation6], %s223
        %s225 = sand.u32 %s78, 1
        %s226 = smul.addr %s225, 640
        %s227 = scalar_lea.vmem [#allocation5], %s226
        // Predicated region
        $region37: #{tpu_custom_call.1} parent=31 // pred_check
          %p228 = pneg %p91
        $region38: #{tpu_custom_call.1} parent=31 // pred_check_branch
          %230 = sbr.rel (%p228) target = $region40
        $region39: #{tpu_custom_call.1} parent=31 // pred_region
          %231 = dma.done %s224, 10240
        $region40: #{tpu_custom_call.1} parent=31 // pred_fallthru
          _
        %p232 = pneg %p63
        %p233 = pneg %p60
        %s234 = sand.u32 %s78, 1
        %s235 = scalar_lea.sflag [#allocation6], %s234
        %s236 = sand.u32 %s78, 1
        %s237 = smul.addr %s236, 640
        %s238 = scalar_lea.vmem [#allocation5], %s237
        %p239 = pneg %p91
        %p240 = pneg %p88
        %p241 = scmp.lt.s32.totalorder %s27, 2
        %s242 = scalar_select %p241, %s27, 2
        %s243 = scalar_lea.vmem %s2, %s242
        %p244 = pneg %p117
        %p245 = pneg %p114
        %p246 = pneg %p145
        %p247 = pneg %p142
        %s248 = sand.u32 %s132, 1
        %s249 = scalar_lea.sflag [#allocation4], %s248
        %s250 = sand.u32 %s132, 1
        %s251 = smul.addr %s250, 160
        %s252 = scalar_lea.vmem [#allocation7], %s251
        %s253 = smul.u32 20, %s26
        %s254 = smul.u32 5, %s28
        %s255 = smul.u32 80, %s28
        %p256 = scmp.lt.s32.totalorder %s27, 2
        %s257 = scalar_select %p256, %s27, 2
        %s258 = scalar_lea.vmem %s2, %s257
        %s259 = smul.u32 20, %s26
        %p260 = scmp.eq.s32.totalorder %s28, 0
        // Predicated region
        $region41: #{tpu_custom_call.1} parent=31 // pred_check
          %p261 = pneg %p260
        $region42: #{tpu_custom_call.1} parent=31 // pred_check_branch
          %263 = sbr.rel (%p261) target = $region44
        $region43: #{tpu_custom_call.1} parent=31 // pred_region
          %264 = vst [vmem:[%s252] sm:$0xff] 0.0
          %265 = vst [vmem:[%s252 + $0x8] sm:$0xff] 0.0
          %266 = vst [vmem:[%s252 + $0x10] sm:$0xff] 0.0
          %267 = vst [vmem:[%s252 + $0x18] sm:$0xff] 0.0
          %268 = vst [vmem:[%s252 + $0x20] sm:$0xff] 0.0
          %269 = vst [vmem:[%s252 + $0x28] sm:$0xff] 0.0
          %270 = vst [vmem:[%s252 + $0x30] sm:$0xff] 0.0
          %271 = vst [vmem:[%s252 + $0x38] sm:$0xff] 0.0
          %272 = vst [vmem:[%s252 + $0x40] sm:$0xff] 0.0
          %273 = vst [vmem:[%s252 + $0x48] sm:$0xff] 0.0
          %274 = vst [vmem:[%s252 + $0x50] sm:$0xff] 0.0
          %275 = vst [vmem:[%s252 + $0x58] sm:$0xff] 0.0
          %276 = vst [vmem:[%s252 + $0x60] sm:$0xff] 0.0
          %277 = vst [vmem:[%s252 + $0x68] sm:$0xff] 0.0
          %278 = vst [vmem:[%s252 + $0x70] sm:$0xff] 0.0
          %279 = vst [vmem:[%s252 + $0x78] sm:$0xff] 0.0
          %280 = vst [vmem:[%s252 + $0x80] sm:$0xff] 0.0
          %281 = vst [vmem:[%s252 + $0x88] sm:$0xff] 0.0
          %282 = vst [vmem:[%s252 + $0x90] sm:$0xff] 0.0
          %283 = vst [vmem:[%s252 + $0x98] sm:$0xff] 0.0
        $region44: #{tpu_custom_call.1} parent=31 // pred_fallthru
          _
        %v284 = vld [vmem:[%s252] sm:$0xff]
        %v285 = vld [vmem:[%s252 + $0x8] sm:$0xff]
        %v286 = vld [vmem:[%s252 + $0x10] sm:$0xff]
        %v287 = vld [vmem:[%s252 + $0x18] sm:$0xff]
        %v288 = vld [vmem:[%s252 + $0x20] sm:$0xff]
        %v289 = vld [vmem:[%s252 + $0x28] sm:$0xff]
        %v290 = vld [vmem:[%s252 + $0x30] sm:$0xff]
        %v291 = vld [vmem:[%s252 + $0x38] sm:$0xff]
        %v292 = vld [vmem:[%s252 + $0x40] sm:$0xff]
        %v293 = vld [vmem:[%s252 + $0x48] sm:$0xff]
        %v294 = vld [vmem:[%s252 + $0x50] sm:$0xff]
        %v295 = vld [vmem:[%s252 + $0x58] sm:$0xff]
        %v296 = vld [vmem:[%s252 + $0x60] sm:$0xff]
        %v297 = vld [vmem:[%s252 + $0x68] sm:$0xff]
        %v298 = vld [vmem:[%s252 + $0x70] sm:$0xff]
        %v299 = vld [vmem:[%s252 + $0x78] sm:$0xff]
        %v300 = vld [vmem:[%s252 + $0x80] sm:$0xff]
        %v301 = vld [vmem:[%s252 + $0x88] sm:$0xff]
        %v302 = vld [vmem:[%s252 + $0x90] sm:$0xff]
        %v303 = vld [vmem:[%s252 + $0x98] sm:$0xff]
        %v304 = vld [vmem:[#allocation2] sm:$0xff]
        %v305 = vld [vmem:[#allocation2 + $0x8] sm:$0xff]
        %v306 = vld [vmem:[#allocation2 + $0x10] sm:$0xff]
        %v307 = vld [vmem:[#allocation2 + $0x18] sm:$0xff]
        %v308 = vld [vmem:[#allocation2 + $0x20] sm:$0xff]
        %v309 = vld [vmem:[#allocation2 + $0x28] sm:$0xff]
        %v310 = vld [vmem:[#allocation2 + $0x30] sm:$0xff]
        %v311 = vld [vmem:[#allocation2 + $0x38] sm:$0xff]
        %v312 = vld [vmem:[#allocation2 + $0x40] sm:$0xff]
        %v313 = vld [vmem:[#allocation2 + $0x48] sm:$0xff]
        %v314 = vld [vmem:[#allocation2 + $0x50] sm:$0xff]
        %v315 = vld [vmem:[#allocation2 + $0x58] sm:$0xff]
        %v316 = vld [vmem:[#allocation2 + $0x60] sm:$0xff]
        %v317 = vld [vmem:[#allocation2 + $0x68] sm:$0xff]
        %v318 = vld [vmem:[#allocation2 + $0x70] sm:$0xff]
        %v319 = vld [vmem:[#allocation2 + $0x78] sm:$0xff]
        %v320 = vld [vmem:[#allocation2 + $0x80] sm:$0xff]
        %v321 = vld [vmem:[#allocation2 + $0x88] sm:$0xff]
        %v322 = vld [vmem:[#allocation2 + $0x90] sm:$0xff]
        %v323 = vld [vmem:[#allocation2 + $0x98] sm:$0xff]
        %v324 = vld [vmem:[#allocation2 + $0xa0] sm:$0xff]
        %v325 = vld [vmem:[#allocation2 + $0xa8] sm:$0xff]
        %v326 = vld [vmem:[#allocation2 + $0xb0] sm:$0xff]
        %v327 = vld [vmem:[#allocation2 + $0xb8] sm:$0xff]
        %v328 = vld [vmem:[#allocation2 + $0xc0] sm:$0xff]
        %v329 = vld [vmem:[#allocation2 + $0xc8] sm:$0xff]
        %v330 = vld [vmem:[#allocation2 + $0xd0] sm:$0xff]
        %v331 = vld [vmem:[#allocation2 + $0xd8] sm:$0xff]
        %v332 = vld [vmem:[#allocation2 + $0xe0] sm:$0xff]
        %v333 = vld [vmem:[#allocation2 + $0xe8] sm:$0xff]
        %v334 = vld [vmem:[#allocation2 + $0xf0] sm:$0xff]
        %v335 = vld [vmem:[#allocation2 + $0xf8] sm:$0xff]
        %v336 = vld [vmem:[#allocation2 + $0x100] sm:$0xff]
        %v337 = vld [vmem:[#allocation2 + $0x108] sm:$0xff]
        %v338 = vld [vmem:[#allocation2 + $0x110] sm:$0xff]
        %v339 = vld [vmem:[#allocation2 + $0x118] sm:$0xff]
        %v340 = vld [vmem:[#allocation2 + $0x120] sm:$0xff]
        %v341 = vld [vmem:[#allocation2 + $0x128] sm:$0xff]
        %v342 = vld [vmem:[#allocation2 + $0x130] sm:$0xff]
        %v343 = vld [vmem:[#allocation2 + $0x138] sm:$0xff]
        %v344 = vld [vmem:[#allocation2 + $0x140] sm:$0xff]
        %v345 = vld [vmem:[#allocation2 + $0x148] sm:$0xff]
        %v346 = vld [vmem:[#allocation2 + $0x150] sm:$0xff]
        %v347 = vld [vmem:[#allocation2 + $0x158] sm:$0xff]
        %v348 = vld [vmem:[#allocation2 + $0x160] sm:$0xff]
        %v349 = vld [vmem:[#allocation2 + $0x168] sm:$0xff]
        %v350 = vld [vmem:[#allocation2 + $0x170] sm:$0xff]
        %v351 = vld [vmem:[#allocation2 + $0x178] sm:$0xff]
        %v352 = vld [vmem:[#allocation2 + $0x180] sm:$0xff]
        %v353 = vld [vmem:[#allocation2 + $0x188] sm:$0xff]
        %v354 = vld [vmem:[#allocation2 + $0x190] sm:$0xff]
        %v355 = vld [vmem:[#allocation2 + $0x198] sm:$0xff]
        %v356 = vld [vmem:[#allocation2 + $0x1a0] sm:$0xff]
        %v357 = vld [vmem:[#allocation2 + $0x1a8] sm:$0xff]
        %v358 = vld [vmem:[#allocation2 + $0x1b0] sm:$0xff]
        %v359 = vld [vmem:[#allocation2 + $0x1b8] sm:$0xff]
        %v360 = vld [vmem:[#allocation2 + $0x1c0] sm:$0xff]
        %v361 = vld [vmem:[#allocation2 + $0x1c8] sm:$0xff]
        %v362 = vld [vmem:[#allocation2 + $0x1d0] sm:$0xff]
        %v363 = vld [vmem:[#allocation2 + $0x1d8] sm:$0xff]
        %v364 = vld [vmem:[#allocation2 + $0x1e0] sm:$0xff]
        %v365 = vld [vmem:[#allocation2 + $0x1e8] sm:$0xff]
        %v366 = vld [vmem:[#allocation2 + $0x1f0] sm:$0xff]
        %v367 = vld [vmem:[#allocation2 + $0x1f8] sm:$0xff]
        %v368 = vld [vmem:[#allocation2 + $0x200] sm:$0xff]
        %v369 = vld [vmem:[#allocation2 + $0x208] sm:$0xff]
        %v370 = vld [vmem:[#allocation2 + $0x210] sm:$0xff]
        %v371 = vld [vmem:[#allocation2 + $0x218] sm:$0xff]
        %v372 = vld [vmem:[#allocation2 + $0x220] sm:$0xff]
        %v373 = vld [vmem:[#allocation2 + $0x228] sm:$0xff]
        %v374 = vld [vmem:[#allocation2 + $0x230] sm:$0xff]
        %v375 = vld [vmem:[#allocation2 + $0x238] sm:$0xff]
        %v376 = vld [vmem:[#allocation2 + $0x240] sm:$0xff]
        %v377 = vld [vmem:[#allocation2 + $0x248] sm:$0xff]
        %v378 = vld [vmem:[#allocation2 + $0x250] sm:$0xff]
        %v379 = vld [vmem:[#allocation2 + $0x258] sm:$0xff]
        %v380 = vld [vmem:[#allocation2 + $0x260] sm:$0xff]
        %v381 = vld [vmem:[#allocation2 + $0x268] sm:$0xff]
        %v382 = vld [vmem:[#allocation2 + $0x270] sm:$0xff]
        %v383 = vld [vmem:[#allocation2 + $0x278] sm:$0xff]
        %v384 = vld [vmem:[#allocation2 + $0x280] sm:$0xff]
        %v385 = vld [vmem:[#allocation2 + $0x288] sm:$0xff]
        %v386 = vld [vmem:[#allocation2 + $0x290] sm:$0xff]
        %v387 = vld [vmem:[#allocation2 + $0x298] sm:$0xff]
        %v388 = vld [vmem:[#allocation2 + $0x2a0] sm:$0xff]
        %v389 = vld [vmem:[#allocation2 + $0x2a8] sm:$0xff]
        %v390 = vld [vmem:[#allocation2 + $0x2b0] sm:$0xff]
        %v391 = vld [vmem:[#allocation2 + $0x2b8] sm:$0xff]
        %v392 = vld [vmem:[#allocation2 + $0x2c0] sm:$0xff]
        %v393 = vld [vmem:[#allocation2 + $0x2c8] sm:$0xff]
        %v394 = vld [vmem:[#allocation2 + $0x2d0] sm:$0xff]
        %v395 = vld [vmem:[#allocation2 + $0x2d8] sm:$0xff]
        %v396 = vld [vmem:[#allocation2 + $0x2e0] sm:$0xff]
        %v397 = vld [vmem:[#allocation2 + $0x2e8] sm:$0xff]
        %v398 = vld [vmem:[#allocation2 + $0x2f0] sm:$0xff]
        %v399 = vld [vmem:[#allocation2 + $0x2f8] sm:$0xff]
        %v400 = vld [vmem:[#allocation2 + $0x300] sm:$0xff]
        %v401 = vld [vmem:[#allocation2 + $0x308] sm:$0xff]
        %v402 = vld [vmem:[#allocation2 + $0x310] sm:$0xff]
        %v403 = vld [vmem:[#allocation2 + $0x318] sm:$0xff]
        %v404 = vld [vmem:[%s227] sm:$0xff]
        %v405 = vld [vmem:[%s227 + $0x8] sm:$0xff]
        %v406 = vld [vmem:[%s227 + $0x10] sm:$0xff]
        %v407 = vld [vmem:[%s227 + $0x18] sm:$0xff]
        %v408 = vld [vmem:[%s227 + $0x20] sm:$0xff]
        %v409 = vld [vmem:[%s227 + $0x28] sm:$0xff]
        %v410 = vld [vmem:[%s227 + $0x30] sm:$0xff]
        %v411 = vld [vmem:[%s227 + $0x38] sm:$0xff]
        %v412 = vld [vmem:[%s227 + $0x40] sm:$0xff]
        %v413 = vld [vmem:[%s227 + $0x48] sm:$0xff]
        %v414 = vld [vmem:[%s227 + $0x50] sm:$0xff]
        %v415 = vld [vmem:[%s227 + $0x58] sm:$0xff]
        %v416 = vld [vmem:[%s227 + $0x60] sm:$0xff]
        %v417 = vld [vmem:[%s227 + $0x68] sm:$0xff]
        %v418 = vld [vmem:[%s227 + $0x70] sm:$0xff]
        %v419 = vld [vmem:[%s227 + $0x78] sm:$0xff]
        %v420 = vld [vmem:[%s227 + $0x80] sm:$0xff]
        %v421 = vld [vmem:[%s227 + $0x88] sm:$0xff]
        %v422 = vld [vmem:[%s227 + $0x90] sm:$0xff]
        %v423 = vld [vmem:[%s227 + $0x98] sm:$0xff]
        %v424 = vld [vmem:[%s227 + $0xa0] sm:$0xff]
        %v425 = vld [vmem:[%s227 + $0xa8] sm:$0xff]
        %v426 = vld [vmem:[%s227 + $0xb0] sm:$0xff]
        %v427 = vld [vmem:[%s227 + $0xb8] sm:$0xff]
        %v428 = vld [vmem:[%s227 + $0xc0] sm:$0xff]
        %v429 = vld [vmem:[%s227 + $0xc8] sm:$0xff]
        %v430 = vld [vmem:[%s227 + $0xd0] sm:$0xff]
        %v431 = vld [vmem:[%s227 + $0xd8] sm:$0xff]
        %v432 = vld [vmem:[%s227 + $0xe0] sm:$0xff]
        %v433 = vld [vmem:[%s227 + $0xe8] sm:$0xff]
        %v434 = vld [vmem:[%s227 + $0xf0] sm:$0xff]
        %v435 = vld [vmem:[%s227 + $0xf8] sm:$0xff]
        %v436 = vld [vmem:[%s227 + $0x100] sm:$0xff]
        %v437 = vld [vmem:[%s227 + $0x108] sm:$0xff]
        %v438 = vld [vmem:[%s227 + $0x110] sm:$0xff]
        %v439 = vld [vmem:[%s227 + $0x118] sm:$0xff]
        %v440 = vld [vmem:[%s227 + $0x120] sm:$0xff]
        %v441 = vld [vmem:[%s227 + $0x128] sm:$0xff]
        %v442 = vld [vmem:[%s227 + $0x130] sm:$0xff]
        %v443 = vld [vmem:[%s227 + $0x138] sm:$0xff]
        %v444 = vld [vmem:[%s227 + $0x140] sm:$0xff]
        %v445 = vld [vmem:[%s227 + $0x148] sm:$0xff]
        %v446 = vld [vmem:[%s227 + $0x150] sm:$0xff]
        %v447 = vld [vmem:[%s227 + $0x158] sm:$0xff]
        %v448 = vld [vmem:[%s227 + $0x160] sm:$0xff]
        %v449 = vld [vmem:[%s227 + $0x168] sm:$0xff]
        %v450 = vld [vmem:[%s227 + $0x170] sm:$0xff]
        %v451 = vld [vmem:[%s227 + $0x178] sm:$0xff]
        %v452 = vld [vmem:[%s227 + $0x180] sm:$0xff]
        %v453 = vld [vmem:[%s227 + $0x188] sm:$0xff]
        %v454 = vld [vmem:[%s227 + $0x190] sm:$0xff]
        %v455 = vld [vmem:[%s227 + $0x198] sm:$0xff]
        %v456 = vld [vmem:[%s227 + $0x1a0] sm:$0xff]
        %v457 = vld [vmem:[%s227 + $0x1a8] sm:$0xff]
        %v458 = vld [vmem:[%s227 + $0x1b0] sm:$0xff]
        %v459 = vld [vmem:[%s227 + $0x1b8] sm:$0xff]
        %v460 = vld [vmem:[%s227 + $0x1c0] sm:$0xff]
        %v461 = vld [vmem:[%s227 + $0x1c8] sm:$0xff]
        %v462 = vld [vmem:[%s227 + $0x1d0] sm:$0xff]
        %v463 = vld [vmem:[%s227 + $0x1d8] sm:$0xff]
        %v464 = vld [vmem:[%s227 + $0x1e0] sm:$0xff]
        %v465 = vld [vmem:[%s227 + $0x1e8] sm:$0xff]
        %v466 = vld [vmem:[%s227 + $0x1f0] sm:$0xff]
        %v467 = vld [vmem:[%s227 + $0x1f8] sm:$0xff]
        %v468 = vld [vmem:[%s227 + $0x200] sm:$0xff]
        %v469 = vld [vmem:[%s227 + $0x208] sm:$0xff]
        %v470 = vld [vmem:[%s227 + $0x210] sm:$0xff]
        %v471 = vld [vmem:[%s227 + $0x218] sm:$0xff]
        %v472 = vld [vmem:[%s227 + $0x220] sm:$0xff]
        %v473 = vld [vmem:[%s227 + $0x228] sm:$0xff]
        %v474 = vld [vmem:[%s227 + $0x230] sm:$0xff]
        %v475 = vld [vmem:[%s227 + $0x238] sm:$0xff]
        %v476 = vld [vmem:[%s227 + $0x240] sm:$0xff]
        %v477 = vld [vmem:[%s227 + $0x248] sm:$0xff]
        %v478 = vld [vmem:[%s227 + $0x250] sm:$0xff]
        %v479 = vld [vmem:[%s227 + $0x258] sm:$0xff]
        %v480 = vld [vmem:[%s227 + $0x260] sm:$0xff]
        %v481 = vld [vmem:[%s227 + $0x268] sm:$0xff]
        %v482 = vld [vmem:[%s227 + $0x270] sm:$0xff]
        %v483 = vld [vmem:[%s227 + $0x278] sm:$0xff]
        %484 = vmatprep.subr.mxu0 0.0
        %485 = vmatpush1.msra.mxu0 %v419
        %486 = vmatprep.subr.mxu0 0.0
        %487 = vmatpush1.msra.mxu0 %v418
        %488 = vmatprep.subr.mxu0 0.0
        %489 = vmatpush1.msra.mxu0 %v417
        %490 = vmatprep.subr.mxu0 0.0
        %491 = vmatpush1.msra.mxu0 %v416
        %492 = vmatprep.subr.mxu0 0.0
        %493 = vmatpush1.msra.mxu0 %v415
        %494 = vmatprep.subr.mxu0 0.0
        %495 = vmatpush1.msra.mxu0 %v414
        %496 = vmatprep.subr.mxu0 0.0
        %497 = vmatpush1.msra.mxu0 %v413
        %498 = vmatprep.subr.mxu0 0.0
        %499 = vmatpush1.msra.mxu0 %v412
        %500 = vmatprep.subr.mxu0 0.0
        %501 = vmatpush1.msra.mxu0 %v411
        %502 = vmatprep.subr.mxu0 0.0
        %503 = vmatpush1.msra.mxu0 %v410
        %504 = vmatprep.subr.mxu0 0.0
        %505 = vmatpush1.msra.mxu0 %v409
        %506 = vmatprep.subr.mxu0 0.0
        %507 = vmatpush1.msra.mxu0 %v408
        %508 = vmatprep.subr.mxu0 0.0
        %509 = vmatpush1.msra.mxu0 %v407
        %510 = vmatprep.subr.mxu0 0.0
        %511 = vmatpush1.msra.mxu0 %v406
        %512 = vmatprep.subr.mxu0 0.0
        %513 = vmatpush1.msra.mxu0 %v405
        %514 = vmatprep.subr.mxu0 0.0
        %515 = vmatpush1.msra.mxu0 %v404
        %516 = vmatprep.subr.mxu0 0.0
        %517 = vmatpush2.msra.mxu0 %v435
        %518 = vmatprep.subr.mxu0 0.0
        %519 = vmatpush2.msra.mxu0 %v434
        %520 = vmatprep.subr.mxu0 0.0
        %521 = vmatpush2.msra.mxu0 %v433
        %522 = vmatprep.subr.mxu0 0.0
        %523 = vmatpush2.msra.mxu0 %v432
        %524 = vmatprep.subr.mxu0 0.0
        %525 = vmatpush2.msra.mxu0 %v431
        %526 = vmatprep.subr.mxu0 0.0
        %527 = vmatpush2.msra.mxu0 %v430
        %528 = vmatprep.subr.mxu0 0.0
        %529 = vmatpush2.msra.mxu0 %v429
        %530 = vmatprep.subr.mxu0 0.0
        %531 = vmatpush2.msra.mxu0 %v428
        %532 = vmatprep.subr.mxu0 0.0
        %533 = vmatpush2.msra.mxu0 %v427
        %534 = vmatprep.subr.mxu0 0.0
        %535 = vmatpush2.msra.mxu0 %v426
        %536 = vmatprep.subr.mxu0 0.0
        %537 = vmatpush2.msra.mxu0 %v425
        %538 = vmatprep.subr.mxu0 0.0
        %539 = vmatpush2.msra.mxu0 %v424
        %540 = vmatprep.subr.mxu0 0.0
        %541 = vmatpush2.msra.mxu0 %v423
        %542 = vmatprep.subr.mxu0 0.0
        %543 = vmatpush2.msra.mxu0 %v422
        %544 = vmatprep.subr.mxu0 0.0
        %545 = vmatpush2.msra.mxu0 %v421
        %546 = vmatprep.subr.mxu0 0.0
        %547 = vmatpush2.msra.mxu0 %v420
        %548 = vmatprep.mubr.f32.mxu0 %v305
        %549 = vmatmul.mubr.f32.gmra.mxu0 %v304
        %v550 = vpop.f32.mrf.mxu0
        %v551 = vadd.f32 0.0, %v550
        %v552 = vpop.f32.mrf.mxu0
        %553 = vmatprep.mubr.f32.mxu0 %v310
        %554 = vmatmul.mubr.f32.gmra.mxu0 %v309
        %v555 = vpop.f32.mrf.mxu0
        %v556 = vadd.f32 0.0, %v555
        %v557 = vpop.f32.mrf.mxu0
        %558 = vmatprep.mubr.f32.mxu0 %v315
        %559 = vmatmul.mubr.f32.gmra.mxu0 %v314
        %v560 = vpop.f32.mrf.mxu0
        %v561 = vadd.f32 0.0, %v560
        %v562 = vpop.f32.mrf.mxu0
        %563 = vmatprep.mubr.f32.mxu0 %v320
        %564 = vmatmul.mubr.f32.gmra.mxu0 %v319
        %v565 = vpop.f32.mrf.mxu0
        %v566 = vadd.f32 0.0, %v565
        %v567 = vpop.f32.mrf.mxu0
        %568 = vmatprep.mubr.f32.mxu0 %v325
        %569 = vmatmul.mubr.f32.gmra.mxu0 %v324
        %v570 = vpop.f32.mrf.mxu0
        %v571 = vadd.f32 0.0, %v570
        %v572 = vpop.f32.mrf.mxu0
        %573 = vmatprep.mubr.f32.mxu0 %v330
        %574 = vmatmul.mubr.f32.gmra.mxu0 %v329
        %v575 = vpop.f32.mrf.mxu0
        %v576 = vadd.f32 0.0, %v575
        %v577 = vpop.f32.mrf.mxu0
        %578 = vmatprep.mubr.f32.mxu0 %v335
        %579 = vmatmul.mubr.f32.gmra.mxu0 %v334
        %v580 = vpop.f32.mrf.mxu0
        %v581 = vadd.f32 0.0, %v580
        %v582 = vpop.f32.mrf.mxu0
        %583 = vmatprep.mubr.f32.mxu0 %v340
        %584 = vmatmul.mubr.f32.gmra.mxu0 %v339
        %v585 = vpop.f32.mrf.mxu0
        %v586 = vadd.f32 0.0, %v585
        %v587 = vpop.f32.mrf.mxu0
        %588 = vmatprep.mubr.f32.mxu0 %v345
        %589 = vmatmul.mubr.f32.gmra.mxu0 %v344
        %v590 = vpop.f32.mrf.mxu0
        %v591 = vadd.f32 0.0, %v590
        %v592 = vpop.f32.mrf.mxu0
        %593 = vmatprep.mubr.f32.mxu0 %v350
        %594 = vmatmul.mubr.f32.gmra.mxu0 %v349
        %v595 = vpop.f32.mrf.mxu0
        %v596 = vadd.f32 0.0, %v595
        %v597 = vpop.f32.mrf.mxu0
        %598 = vmatprep.mubr.f32.mxu0 %v355
        %599 = vmatmul.mubr.f32.gmra.mxu0 %v354
        %v600 = vpop.f32.mrf.mxu0
        %v601 = vadd.f32 0.0, %v600
        %v602 = vpop.f32.mrf.mxu0
        %603 = vmatprep.mubr.f32.mxu0 %v360
        %604 = vmatmul.mubr.f32.gmra.mxu0 %v359
        %v605 = vpop.f32.mrf.mxu0
        %v606 = vadd.f32 0.0, %v605
        %v607 = vpop.f32.mrf.mxu0
        %608 = vmatprep.mubr.f32.mxu0 %v365
        %609 = vmatmul.mubr.f32.gmra.mxu0 %v364
        %v610 = vpop.f32.mrf.mxu0
        %v611 = vadd.f32 0.0, %v610
        %v612 = vpop.f32.mrf.mxu0
        %613 = vmatprep.mubr.f32.mxu0 %v370
        %614 = vmatmul.mubr.f32.gmra.mxu0 %v369
        %v615 = vpop.f32.mrf.mxu0
        %v616 = vadd.f32 0.0, %v615
        %v617 = vpop.f32.mrf.mxu0
        %618 = vmatprep.mubr.f32.mxu0 %v375
        %619 = vmatmul.mubr.f32.gmra.mxu0 %v374
        %v620 = vpop.f32.mrf.mxu0
        %v621 = vadd.f32 0.0, %v620
        %v622 = vpop.f32.mrf.mxu0
        %623 = vmatprep.mubr.f32.mxu0 %v380
        %624 = vmatmul.mubr.f32.gmra.mxu0 %v379
        %v625 = vpop.f32.mrf.mxu0
        %v626 = vadd.f32 0.0, %v625
        %v627 = vpop.f32.mrf.mxu0
        %628 = vmatprep.mubr.f32.mxu0 %v385
        %629 = vmatmul.mubr.f32.gmra.mxu0 %v384
        %v630 = vpop.f32.mrf.mxu0
        %v631 = vadd.f32 0.0, %v630
        %v632 = vpop.f32.mrf.mxu0
        %633 = vmatprep.mubr.f32.mxu0 %v390
        %634 = vmatmul.mubr.f32.gmra.mxu0 %v389
        %v635 = vpop.f32.mrf.mxu0
        %v636 = vadd.f32 0.0, %v635
        %v637 = vpop.f32.mrf.mxu0
        %638 = vmatprep.mubr.f32.mxu0 %v395
        %639 = vmatmul.mubr.f32.gmra.mxu0 %v394
        %v640 = vpop.f32.mrf.mxu0
        %v641 = vadd.f32 0.0, %v640
        %v642 = vpop.f32.mrf.mxu0
        %643 = vmatprep.mubr.f32.mxu0 %v400
        %644 = vmatmul.mubr.f32.gmra.mxu0 %v399
        %v645 = vpop.f32.mrf.mxu0
        %v646 = vadd.f32 0.0, %v645
        %v647 = vpop.f32.mrf.mxu0
        %648 = vdwg.mxu0
        %649 = vmatprep.subr.mxu0 0.0
        %650 = vmatpush1.msra.mxu0 %v451
        %651 = vmatprep.subr.mxu0 0.0
        %652 = vmatpush1.msra.mxu0 %v450
        %653 = vmatprep.subr.mxu0 0.0
        %654 = vmatpush1.msra.mxu0 %v449
        %655 = vmatprep.subr.mxu0 0.0
        %656 = vmatpush1.msra.mxu0 %v448
        %657 = vmatprep.subr.mxu0 0.0
        %658 = vmatpush1.msra.mxu0 %v447
        %659 = vmatprep.subr.mxu0 0.0
        %660 = vmatpush1.msra.mxu0 %v446
        %661 = vmatprep.subr.mxu0 0.0
        %662 = vmatpush1.msra.mxu0 %v445
        %663 = vmatprep.subr.mxu0 0.0
        %664 = vmatpush1.msra.mxu0 %v444
        %665 = vmatprep.subr.mxu0 0.0
        %666 = vmatpush1.msra.mxu0 %v443
        %667 = vmatprep.subr.mxu0 0.0
        %668 = vmatpush1.msra.mxu0 %v442
        %669 = vmatprep.subr.mxu0 0.0
        %670 = vmatpush1.msra.mxu0 %v441
        %671 = vmatprep.subr.mxu0 0.0
        %672 = vmatpush1.msra.mxu0 %v440
        %673 = vmatprep.subr.mxu0 0.0
        %674 = vmatpush1.msra.mxu0 %v439
        %675 = vmatprep.subr.mxu0 0.0
        %676 = vmatpush1.msra.mxu0 %v438
        %677 = vmatprep.subr.mxu0 0.0
        %678 = vmatpush1.msra.mxu0 %v437
        %679 = vmatprep.subr.mxu0 0.0
        %680 = vmatpush1.msra.mxu0 %v436
        %681 = vmatprep.subr.mxu0 0.0
        %682 = vmatpush2.msra.mxu0 %v467
        %683 = vmatprep.subr.mxu0 0.0
        %684 = vmatpush2.msra.mxu0 %v466
        %685 = vmatprep.subr.mxu0 0.0
        %686 = vmatpush2.msra.mxu0 %v465
        %687 = vmatprep.subr.mxu0 0.0
        %688 = vmatpush2.msra.mxu0 %v464
        %689 = vmatprep.subr.mxu0 0.0
        %690 = vmatpush2.msra.mxu0 %v463
        %691 = vmatprep.subr.mxu0 0.0
        %692 = vmatpush2.msra.mxu0 %v462
        %693 = vmatprep.subr.mxu0 0.0
        %694 = vmatpush2.msra.mxu0 %v461
        %695 = vmatprep.subr.mxu0 0.0
        %696 = vmatpush2.msra.mxu0 %v460
        %697 = vmatprep.subr.mxu0 0.0
        %698 = vmatpush2.msra.mxu0 %v459
        %699 = vmatprep.subr.mxu0 0.0
        %700 = vmatpush2.msra.mxu0 %v458
        %701 = vmatprep.subr.mxu0 0.0
        %702 = vmatpush2.msra.mxu0 %v457
        %703 = vmatprep.subr.mxu0 0.0
        %704 = vmatpush2.msra.mxu0 %v456
        %705 = vmatprep.subr.mxu0 0.0
        %706 = vmatpush2.msra.mxu0 %v455
        %707 = vmatprep.subr.mxu0 0.0
        %708 = vmatpush2.msra.mxu0 %v454
        %709 = vmatprep.subr.mxu0 0.0
        %710 = vmatpush2.msra.mxu0 %v453
        %711 = vmatprep.subr.mxu0 0.0
        %712 = vmatpush2.msra.mxu0 %v452
        %713 = vmatprep.mubr.f32.mxu0 %v307
        %714 = vmatmul.mubr.f32.gmra.mxu0 %v306
        %v715 = vpop.f32.mrf.mxu0
        %v716 = vadd.f32 %v551, %v715
        %v717 = vpop.f32.mrf.mxu0
        %718 = vmatprep.mubr.f32.mxu0 %v312
        %719 = vmatmul.mubr.f32.gmra.mxu0 %v311
        %v720 = vpop.f32.mrf.mxu0
        %v721 = vadd.f32 %v556, %v720
        %v722 = vpop.f32.mrf.mxu0
        %723 = vmatprep.mubr.f32.mxu0 %v317
        %724 = vmatmul.mubr.f32.gmra.mxu0 %v316
        %v725 = vpop.f32.mrf.mxu0
        %v726 = vadd.f32 %v561, %v725
        %v727 = vpop.f32.mrf.mxu0
        %728 = vmatprep.mubr.f32.mxu0 %v322
        %729 = vmatmul.mubr.f32.gmra.mxu0 %v321
        %v730 = vpop.f32.mrf.mxu0
        %v731 = vadd.f32 %v566, %v730
        %v732 = vpop.f32.mrf.mxu0
        %733 = vmatprep.mubr.f32.mxu0 %v327
        %734 = vmatmul.mubr.f32.gmra.mxu0 %v326
        %v735 = vpop.f32.mrf.mxu0
        %v736 = vadd.f32 %v571, %v735
        %v737 = vpop.f32.mrf.mxu0
        %738 = vmatprep.mubr.f32.mxu0 %v332
        %739 = vmatmul.mubr.f32.gmra.mxu0 %v331
        %v740 = vpop.f32.mrf.mxu0
        %v741 = vadd.f32 %v576, %v740
        %v742 = vpop.f32.mrf.mxu0
        %743 = vmatprep.mubr.f32.mxu0 %v337
        %744 = vmatmul.mubr.f32.gmra.mxu0 %v336
        %v745 = vpop.f32.mrf.mxu0
        %v746 = vadd.f32 %v581, %v745
        %v747 = vpop.f32.mrf.mxu0
        %748 = vmatprep.mubr.f32.mxu0 %v342
        %749 = vmatmul.mubr.f32.gmra.mxu0 %v341
        %v750 = vpop.f32.mrf.mxu0
        %v751 = vadd.f32 %v586, %v750
        %v752 = vpop.f32.mrf.mxu0
        %753 = vmatprep.mubr.f32.mxu0 %v347
        %754 = vmatmul.mubr.f32.gmra.mxu0 %v346
        %v755 = vpop.f32.mrf.mxu0
        %v756 = vadd.f32 %v591, %v755
        %v757 = vpop.f32.mrf.mxu0
        %758 = vmatprep.mubr.f32.mxu0 %v352
        %759 = vmatmul.mubr.f32.gmra.mxu0 %v351
        %v760 = vpop.f32.mrf.mxu0
        %v761 = vadd.f32 %v596, %v760
        %v762 = vpop.f32.mrf.mxu0
        %763 = vmatprep.mubr.f32.mxu0 %v357
        %764 = vmatmul.mubr.f32.gmra.mxu0 %v356
        %v765 = vpop.f32.mrf.mxu0
        %v766 = vadd.f32 %v601, %v765
        %v767 = vpop.f32.mrf.mxu0
        %768 = vmatprep.mubr.f32.mxu0 %v362
        %769 = vmatmul.mubr.f32.gmra.mxu0 %v361
        %v770 = vpop.f32.mrf.mxu0
        %v771 = vadd.f32 %v606, %v770
        %v772 = vpop.f32.mrf.mxu0
        %773 = vmatprep.mubr.f32.mxu0 %v367
        %774 = vmatmul.mubr.f32.gmra.mxu0 %v366
        %v775 = vpop.f32.mrf.mxu0
        %v776 = vadd.f32 %v611, %v775
        %v777 = vpop.f32.mrf.mxu0
        %778 = vmatprep.mubr.f32.mxu0 %v372
        %779 = vmatmul.mubr.f32.gmra.mxu0 %v371
        %v780 = vpop.f32.mrf.mxu0
        %v781 = vadd.f32 %v616, %v780
        %v782 = vpop.f32.mrf.mxu0
        %783 = vmatprep.mubr.f32.mxu0 %v377
        %784 = vmatmul.mubr.f32.gmra.mxu0 %v376
        %v785 = vpop.f32.mrf.mxu0
        %v786 = vadd.f32 %v621, %v785
        %v787 = vpop.f32.mrf.mxu0
        %788 = vmatprep.mubr.f32.mxu0 %v382
        %789 = vmatmul.mubr.f32.gmra.mxu0 %v381
        %v790 = vpop.f32.mrf.mxu0
        %v791 = vadd.f32 %v626, %v790
        %v792 = vpop.f32.mrf.mxu0
        %793 = vmatprep.mubr.f32.mxu0 %v387
        %794 = vmatmul.mubr.f32.gmra.mxu0 %v386
        %v795 = vpop.f32.mrf.mxu0
        %v796 = vadd.f32 %v631, %v795
        %v797 = vpop.f32.mrf.mxu0
        %798 = vmatprep.mubr.f32.mxu0 %v392
        %799 = vmatmul.mubr.f32.gmra.mxu0 %v391
        %v800 = vpop.f32.mrf.mxu0
        %v801 = vadd.f32 %v636, %v800
        %v802 = vpop.f32.mrf.mxu0
        %803 = vmatprep.mubr.f32.mxu0 %v397
        %804 = vmatmul.mubr.f32.gmra.mxu0 %v396
        %v805 = vpop.f32.mrf.mxu0
        %v806 = vadd.f32 %v641, %v805
        %v807 = vpop.f32.mrf.mxu0
        %808 = vmatprep.mubr.f32.mxu0 %v402
        %809 = vmatmul.mubr.f32.gmra.mxu0 %v401
        %v810 = vpop.f32.mrf.mxu0
        %v811 = vadd.f32 %v646, %v810
        %v812 = vpop.f32.mrf.mxu0
        %813 = vdwg.mxu0
        %814 = vmatprep.subr.mxu0 0.0
        %815 = vmatpush1.msra.mxu0 %v483
        %816 = vmatprep.subr.mxu0 0.0
        %817 = vmatpush1.msra.mxu0 %v482
        %818 = vmatprep.subr.mxu0 0.0
        %819 = vmatpush1.msra.mxu0 %v481
        %820 = vmatprep.subr.mxu0 0.0
        %821 = vmatpush1.msra.mxu0 %v480
        %822 = vmatprep.subr.mxu0 0.0
        %823 = vmatpush1.msra.mxu0 %v479
        %824 = vmatprep.subr.mxu0 0.0
        %825 = vmatpush1.msra.mxu0 %v478
        %826 = vmatprep.subr.mxu0 0.0
        %827 = vmatpush1.msra.mxu0 %v477
        %828 = vmatprep.subr.mxu0 0.0
        %829 = vmatpush1.msra.mxu0 %v476
        %830 = vmatprep.subr.mxu0 0.0
        %831 = vmatpush1.msra.mxu0 %v475
        %832 = vmatprep.subr.mxu0 0.0
        %833 = vmatpush1.msra.mxu0 %v474
        %834 = vmatprep.subr.mxu0 0.0
        %835 = vmatpush1.msra.mxu0 %v473
        %836 = vmatprep.subr.mxu0 0.0
        %837 = vmatpush1.msra.mxu0 %v472
        %838 = vmatprep.subr.mxu0 0.0
        %839 = vmatpush1.msra.mxu0 %v471
        %840 = vmatprep.subr.mxu0 0.0
        %841 = vmatpush1.msra.mxu0 %v470
        %842 = vmatprep.subr.mxu0 0.0
        %843 = vmatpush1.msra.mxu0 %v469
        %844 = vmatprep.subr.mxu0 0.0
        %845 = vmatpush1.msra.mxu0 %v468
        %846 = vmatprep.subr.mxu0 0.0
        %847 = vmatpush2.msra.mxu0 0.0
        %848 = vmatprep.subr.mxu0 0.0
        %849 = vmatpush2.msra.mxu0 0.0
        %850 = vmatprep.subr.mxu0 0.0
        %851 = vmatpush2.msra.mxu0 0.0
        %852 = vmatprep.subr.mxu0 0.0
        %853 = vmatpush2.msra.mxu0 0.0
        %854 = vmatprep.subr.mxu0 0.0
        %855 = vmatpush2.msra.mxu0 0.0
        %856 = vmatprep.subr.mxu0 0.0
        %857 = vmatpush2.msra.mxu0 0.0
        %858 = vmatprep.subr.mxu0 0.0
        %859 = vmatpush2.msra.mxu0 0.0
        %860 = vmatprep.subr.mxu0 0.0
        %861 = vmatpush2.msra.mxu0 0.0
        %862 = vmatprep.subr.mxu0 0.0
        %863 = vmatpush2.msra.mxu0 0.0
        %864 = vmatprep.subr.mxu0 0.0
        %865 = vmatpush2.msra.mxu0 0.0
        %866 = vmatprep.subr.mxu0 0.0
        %867 = vmatpush2.msra.mxu0 0.0
        %868 = vmatprep.subr.mxu0 0.0
        %869 = vmatpush2.msra.mxu0 0.0
        %870 = vmatprep.subr.mxu0 0.0
        %871 = vmatpush2.msra.mxu0 0.0
        %872 = vmatprep.subr.mxu0 0.0
        %873 = vmatpush2.msra.mxu0 0.0
        %874 = vmatprep.subr.mxu0 0.0
        %875 = vmatpush2.msra.mxu0 0.0
        %876 = vmatprep.subr.mxu0 0.0
        %877 = vmatpush2.msra.mxu0 0.0
        %878 = vmatprep.mubr.f32.mxu0 0.0
        %879 = vmatmul.mubr.f32.gmra.mxu0 %v308
        %v880 = vpop.f32.mrf.mxu0
        %v881 = vadd.f32 %v716, %v880
        %v882 = vpop.f32.mrf.mxu0
        %883 = vmatprep.mubr.f32.mxu0 0.0
        %884 = vmatmul.mubr.f32.gmra.mxu0 %v313
        %v885 = vpop.f32.mrf.mxu0
        %v886 = vadd.f32 %v721, %v885
        %v887 = vpop.f32.mrf.mxu0
        %888 = vmatprep.mubr.f32.mxu0 0.0
        %889 = vmatmul.mubr.f32.gmra.mxu0 %v318
        %v890 = vpop.f32.mrf.mxu0
        %v891 = vadd.f32 %v726, %v890
        %v892 = vpop.f32.mrf.mxu0
        %893 = vmatprep.mubr.f32.mxu0 0.0
        %894 = vmatmul.mubr.f32.gmra.mxu0 %v323
        %v895 = vpop.f32.mrf.mxu0
        %v896 = vadd.f32 %v731, %v895
        %v897 = vpop.f32.mrf.mxu0
        %898 = vmatprep.mubr.f32.mxu0 0.0
        %899 = vmatmul.mubr.f32.gmra.mxu0 %v328
        %v900 = vpop.f32.mrf.mxu0
        %v901 = vadd.f32 %v736, %v900
        %v902 = vpop.f32.mrf.mxu0
        %903 = vmatprep.mubr.f32.mxu0 0.0
        %904 = vmatmul.mubr.f32.gmra.mxu0 %v333
        %v905 = vpop.f32.mrf.mxu0
        %v906 = vadd.f32 %v741, %v905
        %v907 = vpop.f32.mrf.mxu0
        %908 = vmatprep.mubr.f32.mxu0 0.0
        %909 = vmatmul.mubr.f32.gmra.mxu0 %v338
        %v910 = vpop.f32.mrf.mxu0
        %v911 = vadd.f32 %v746, %v910
        %v912 = vpop.f32.mrf.mxu0
        %913 = vmatprep.mubr.f32.mxu0 0.0
        %914 = vmatmul.mubr.f32.gmra.mxu0 %v343
        %v915 = vpop.f32.mrf.mxu0
        %v916 = vadd.f32 %v751, %v915
        %v917 = vpop.f32.mrf.mxu0
        %918 = vmatprep.mubr.f32.mxu0 0.0
        %919 = vmatmul.mubr.f32.gmra.mxu0 %v348
        %v920 = vpop.f32.mrf.mxu0
        %v921 = vadd.f32 %v756, %v920
        %v922 = vpop.f32.mrf.mxu0
        %923 = vmatprep.mubr.f32.mxu0 0.0
        %924 = vmatmul.mubr.f32.gmra.mxu0 %v353
        %v925 = vpop.f32.mrf.mxu0
        %v926 = vadd.f32 %v761, %v925
        %v927 = vpop.f32.mrf.mxu0
        %928 = vmatprep.mubr.f32.mxu0 0.0
        %929 = vmatmul.mubr.f32.gmra.mxu0 %v358
        %v930 = vpop.f32.mrf.mxu0
        %v931 = vadd.f32 %v766, %v930
        %v932 = vpop.f32.mrf.mxu0
        %933 = vmatprep.mubr.f32.mxu0 0.0
        %934 = vmatmul.mubr.f32.gmra.mxu0 %v363
        %v935 = vpop.f32.mrf.mxu0
        %v936 = vadd.f32 %v771, %v935
        %v937 = vpop.f32.mrf.mxu0
        %938 = vmatprep.mubr.f32.mxu0 0.0
        %939 = vmatmul.mubr.f32.gmra.mxu0 %v368
        %v940 = vpop.f32.mrf.mxu0
        %v941 = vadd.f32 %v776, %v940
        %v942 = vpop.f32.mrf.mxu0
        %943 = vmatprep.mubr.f32.mxu0 0.0
        %944 = vmatmul.mubr.f32.gmra.mxu0 %v373
        %v945 = vpop.f32.mrf.mxu0
        %v946 = vadd.f32 %v781, %v945
        %v947 = vpop.f32.mrf.mxu0
        %948 = vmatprep.mubr.f32.mxu0 0.0
        %949 = vmatmul.mubr.f32.gmra.mxu0 %v378
        %v950 = vpop.f32.mrf.mxu0
        %v951 = vadd.f32 %v786, %v950
        %v952 = vpop.f32.mrf.mxu0
        %953 = vmatprep.mubr.f32.mxu0 0.0
        %954 = vmatmul.mubr.f32.gmra.mxu0 %v383
        %v955 = vpop.f32.mrf.mxu0
        %v956 = vadd.f32 %v791, %v955
        %v957 = vpop.f32.mrf.mxu0
        %958 = vmatprep.mubr.f32.mxu0 0.0
        %959 = vmatmul.mubr.f32.gmra.mxu0 %v388
        %v960 = vpop.f32.mrf.mxu0
        %v961 = vadd.f32 %v796, %v960
        %v962 = vpop.f32.mrf.mxu0
        %963 = vmatprep.mubr.f32.mxu0 0.0
        %964 = vmatmul.mubr.f32.gmra.mxu0 %v393
        %v965 = vpop.f32.mrf.mxu0
        %v966 = vadd.f32 %v801, %v965
        %v967 = vpop.f32.mrf.mxu0
        %968 = vmatprep.mubr.f32.mxu0 0.0
        %969 = vmatmul.mubr.f32.gmra.mxu0 %v398
        %v970 = vpop.f32.mrf.mxu0
        %v971 = vadd.f32 %v806, %v970
        %v972 = vpop.f32.mrf.mxu0
        %973 = vmatprep.mubr.f32.mxu0 0.0
        %974 = vmatmul.mubr.f32.gmra.mxu0 %v403
        %v975 = vpop.f32.mrf.mxu0
        %v976 = vadd.f32 %v811, %v975
        %v977 = vpop.f32.mrf.mxu0
        %978 = vdwg.mxu0
        %v979 = vadd.f32 %v284, %v881
        %v980 = vadd.f32 %v285, %v886
        %v981 = vadd.f32 %v286, %v891
        %v982 = vadd.f32 %v287, %v896
        %v983 = vadd.f32 %v288, %v901
        %v984 = vadd.f32 %v289, %v906
        %v985 = vadd.f32 %v290, %v911
        %v986 = vadd.f32 %v291, %v916
        %v987 = vadd.f32 %v292, %v921
        %v988 = vadd.f32 %v293, %v926
        %v989 = vadd.f32 %v294, %v931
        %v990 = vadd.f32 %v295, %v936
        %v991 = vadd.f32 %v296, %v941
        %v992 = vadd.f32 %v297, %v946
        %v993 = vadd.f32 %v298, %v951
        %v994 = vadd.f32 %v299, %v956
        %v995 = vadd.f32 %v300, %v961
        %v996 = vadd.f32 %v301, %v966
        %v997 = vadd.f32 %v302, %v971
        %v998 = vadd.f32 %v303, %v976
        %999 = vst [vmem:[%s252] sm:$0xff] %v979
        %1000 = vst [vmem:[%s252 + $0x8] sm:$0xff] %v980
        %1001 = vst [vmem:[%s252 + $0x10] sm:$0xff] %v981
        %1002 = vst [vmem:[%s252 + $0x18] sm:$0xff] %v982
        %1003 = vst [vmem:[%s252 + $0x20] sm:$0xff] %v983
        %1004 = vst [vmem:[%s252 + $0x28] sm:$0xff] %v984
        %1005 = vst [vmem:[%s252 + $0x30] sm:$0xff] %v985
        %1006 = vst [vmem:[%s252 + $0x38] sm:$0xff] %v986
        %1007 = vst [vmem:[%s252 + $0x40] sm:$0xff] %v987
        %1008 = vst [vmem:[%s252 + $0x48] sm:$0xff] %v988
        %1009 = vst [vmem:[%s252 + $0x50] sm:$0xff] %v989
        %1010 = vst [vmem:[%s252 + $0x58] sm:$0xff] %v990
        %1011 = vst [vmem:[%s252 + $0x60] sm:$0xff] %v991
        %1012 = vst [vmem:[%s252 + $0x68] sm:$0xff] %v992
        %1013 = vst [vmem:[%s252 + $0x70] sm:$0xff] %v993
        %1014 = vst [vmem:[%s252 + $0x78] sm:$0xff] %v994
        %1015 = vst [vmem:[%s252 + $0x80] sm:$0xff] %v995
        %1016 = vst [vmem:[%s252 + $0x88] sm:$0xff] %v996
        %1017 = vst [vmem:[%s252 + $0x90] sm:$0xff] %v997
        %1018 = vst [vmem:[%s252 + $0x98] sm:$0xff] %v998
        // Predicated region
        $region45: #{tpu_custom_call.1} parent=31 // pred_check
          %p1019 = pneg %p260
        $region46: #{tpu_custom_call.1} parent=31 // pred_check_branch
          %1021 = sbr.rel (%p1019) target = $region48
        $region47: #{tpu_custom_call.1} parent=31 // pred_region
          %v1022 = vld [vmem:[%s252] sm:$0xff]
          %v1023 = vld [vmem:[%s252 + $0x8] sm:$0xff]
          %v1024 = vld [vmem:[%s252 + $0x10] sm:$0xff]
          %v1025 = vld [vmem:[%s252 + $0x18] sm:$0xff]
          %v1026 = vld [vmem:[%s252 + $0x20] sm:$0xff]
          %v1027 = vld [vmem:[%s252 + $0x28] sm:$0xff]
          %v1028 = vld [vmem:[%s252 + $0x30] sm:$0xff]
          %v1029 = vld [vmem:[%s252 + $0x38] sm:$0xff]
          %v1030 = vld [vmem:[%s252 + $0x40] sm:$0xff]
          %v1031 = vld [vmem:[%s252 + $0x48] sm:$0xff]
          %v1032 = vld [vmem:[%s252 + $0x50] sm:$0xff]
          %v1033 = vld [vmem:[%s252 + $0x58] sm:$0xff]
          %v1034 = vld [vmem:[%s252 + $0x60] sm:$0xff]
          %v1035 = vld [vmem:[%s252 + $0x68] sm:$0xff]
          %v1036 = vld [vmem:[%s252 + $0x70] sm:$0xff]
          %v1037 = vld [vmem:[%s252 + $0x78] sm:$0xff]
          %v1038 = vld [vmem:[%s252 + $0x80] sm:$0xff]
          %v1039 = vld [vmem:[%s252 + $0x88] sm:$0xff]
          %v1040 = vld [vmem:[%s252 + $0x90] sm:$0xff]
          %v1041 = vld [vmem:[%s252 + $0x98] sm:$0xff]
          %v1042 = vld [vmem:[%s258] sm:$0x1]
          %v1044 = vlaneseq
          %v1045 = vshrl.u32 %v1044, 7
          %v1046 = vsub.s32 0, %v1045
          %v1047 = vrot.slane %v1042, %v1046
          %v1049 = vadd.f32 %v1022, %v1047
          %v1050 = vadd.f32 %v1023, %v1047
          %v1051 = vadd.f32 %v1024, %v1047
          %v1052 = vadd.f32 %v1025, %v1047
          %v1053 = vadd.f32 %v1026, %v1047
          %v1054 = vadd.f32 %v1027, %v1047
          %v1055 = vadd.f32 %v1028, %v1047
          %v1056 = vadd.f32 %v1029, %v1047
          %v1057 = vadd.f32 %v1030, %v1047
          %v1058 = vadd.f32 %v1031, %v1047
          %v1059 = vadd.f32 %v1032, %v1047
          %v1060 = vadd.f32 %v1033, %v1047
          %v1061 = vadd.f32 %v1034, %v1047
          %v1062 = vadd.f32 %v1035, %v1047
          %v1063 = vadd.f32 %v1036, %v1047
          %v1064 = vadd.f32 %v1037, %v1047
          %v1065 = vadd.f32 %v1038, %v1047
          %v1066 = vadd.f32 %v1039, %v1047
          %v1067 = vadd.f32 %v1040, %v1047
          %v1068 = vadd.f32 %v1041, %v1047
          %1069 = vst [vmem:[%s252] sm:$0xff] %v1049
          %1070 = vst [vmem:[%s252 + $0x8] sm:$0xff] %v1050
          %1071 = vst [vmem:[%s252 + $0x10] sm:$0xff] %v1051
          %1072 = vst [vmem:[%s252 + $0x18] sm:$0xff] %v1052
          %1073 = vst [vmem:[%s252 + $0x20] sm:$0xff] %v1053
          %1074 = vst [vmem:[%s252 + $0x28] sm:$0xff] %v1054
          %1075 = vst [vmem:[%s252 + $0x30] sm:$0xff] %v1055
          %1076 = vst [vmem:[%s252 + $0x38] sm:$0xff] %v1056
          %1077 = vst [vmem:[%s252 + $0x40] sm:$0xff] %v1057
          %1078 = vst [vmem:[%s252 + $0x48] sm:$0xff] %v1058
          %1079 = vst [vmem:[%s252 + $0x50] sm:$0xff] %v1059
          %1080 = vst [vmem:[%s252 + $0x58] sm:$0xff] %v1060
          %1081 = vst [vmem:[%s252 + $0x60] sm:$0xff] %v1061
          %1082 = vst [vmem:[%s252 + $0x68] sm:$0xff] %v1062
          %1083 = vst [vmem:[%s252 + $0x70] sm:$0xff] %v1063
          %1084 = vst [vmem:[%s252 + $0x78] sm:$0xff] %v1064
          %1085 = vst [vmem:[%s252 + $0x80] sm:$0xff] %v1065
          %1086 = vst [vmem:[%s252 + $0x88] sm:$0xff] %v1066
          %1087 = vst [vmem:[%s252 + $0x90] sm:$0xff] %v1067
          %1088 = vst [vmem:[%s252 + $0x98] sm:$0xff] %v1068
        $region48: #{tpu_custom_call.1} parent=31 // pred_fallthru
          _
        %s1089 = sand.u32 %s132, 1
        %s1090 = scalar_lea.sflag [#allocation4], %s1089
        %s1091 = sand.u32 %s132, 1
        %s1092 = smul.addr %s1091, 160
        %s1093 = scalar_lea.vmem [#allocation7], %s1092
        // Predicated region
        $region49: #{tpu_custom_call.1} parent=31 // pred_check
          %p1094 = pneg %p142
        $region50: #{tpu_custom_call.1} parent=31 // pred_check_branch
          %1096 = sbr.rel (%p1094) target = $region52
        $region51: #{tpu_custom_call.1} parent=31 // pred_region
          %s1097 = smul.u32 20, %s26
          %s1099 = ssub.s32 2560, 2560
          %1100 = vsyncadd %s1090, %s1099
          %s1101 = smul.addr %s1097, 3
          %s1102 = sadd.s32 %s27, %s1101
          %s1103 = smul.addr %s1102, 128
          %s1104 = scalar_lea.hbm %s3, %s1103
          %s1105 = sshll.u32 %s1093, 4
          %s1106 = int_to_ptr.vmem [resolvable:$true] %s1105
          %1111 = dma.vmem_to_hbm [thread:$0]  %s1106, 2560, %s1104, %s1090, 128, 384, 8
        $region52: #{tpu_custom_call.1} parent=31 // pred_fallthru
          _
      $region32: #{tpu_custom_call.1} parent=5 // pred_fallthru
        _
      %p1112 = scmp.le.s32.totalorder 2, %s16
      // Predicated region
      $region53: #{tpu_custom_call.1} parent=5 // pred_check
        %p1113 = pneg %p1112
      $region54: #{tpu_custom_call.1} parent=5 // pred_check_branch
        %1115 = sbr.rel (%p1113) target = $region56
      $region55: #{tpu_custom_call.1} parent=5 // pred_region
        %s1116 = ssub.s32 %s16, 2
        // Predicated region
        $region57: #{tpu_custom_call.1} parent=55 // pred_check
          %p1117 = pneg %p148
        $region58: #{tpu_custom_call.1} parent=55 // pred_check_branch
          %1119 = sbr.rel (%p1117) target = $region60
        $region59: #{tpu_custom_call.1} parent=55 // pred_region
          %s1120 = sand.u32 %s133, 1
          %s1121 = scalar_lea.sflag [#allocation4], %s1120
          %s1122 = sand.u32 %s133, 1
          %s1123 = smul.addr %s1122, 160
          %s1124 = scalar_lea.vmem [#allocation7], %s1123
          %1125 = dma.done %s1121, 2560
        $region60: #{tpu_custom_call.1} parent=55 // pred_fallthru
          _
      $region56: #{tpu_custom_call.1} parent=5 // pred_fallthru
        _
    $region6: #{tpu_custom_call.1} parent=1 // loop_footer
      %s20 = sadd.s32 1, %s16
    $region7: #{tpu_custom_call.1} parent=1 // loop_footer_branch
      %15 = sbr.rel target = $region3
    $region8: #{tpu_custom_call.1} parent=1 // loop_exit
      _
    %1126 = vsyncpa [#allocation3], 1
    %s1127 = scalar_lea.sflag [#allocation3], 1
    %1128 = vsyncpa %s1127, 1
    %1129 = vsyncpa [#allocation6], 1
    %s1130 = scalar_lea.sflag [#allocation6], 1
    %1131 = vsyncpa %s1130, 1
    %1132 = vsyncpa [#allocation4], 1
    %s1133 = scalar_lea.sflag [#allocation4], 1
    %1134 = vsyncpa %s1133, 1

</llo_original>
